<compile_context>
chip_gen: v5e
topology: v5e:2x2
jax: 0.10.0
libtpu: 0.0.40
codegen_flags: <defaults>
</compile_context>

<pallas_src>
import jax
import jax.numpy as jnp
import numpy as np
from jax.experimental import pallas as pl
from jax.experimental.pallas import tpu as pltpu


def _round_up(x, m):
    return ((x + m - 1) // m) * m


def _block_diag_repeat(w, k):
    """block_diag(w, w, ..., w) with k copies (built once in the wrapper)."""
    if k == 1:
        return w
    fi, fo = w.shape
    out = jnp.zeros((k * fi, k * fo), w.dtype)
    for i in range(k):
        out = out.at[i * fi:(i + 1) * fi, i * fo:(i + 1) * fo].set(w)
    return out


def msgnet_forward(obs, params, n_agents, action_dim, *,
                   tile_b=2048, compute_dtype=jnp.bfloat16):
    """obs: (B, N, C, H, W) float -> logits (B, action_dim) f32."""
    B = obs.shape[0]
    D = int(np.prod(obs.shape[2:]))
    nm = n_agents - 1

    (w1p, b1p, w2p, b2p, w1m, b1m, w2m, b2m) = params
    Hp = w1p.shape[1]          # message-MLP hidden (32)
    Hh = w1m.shape[1]          # model hidden (32)
    nmhp = nm * Hp             # batched message-hidden width
    ND = n_agents * D          # full obs slab width
    OUT_PAD = _round_up(max(action_dim, 1), 128)

    # ---- weight prep (plain XLA, f32 algebra, done once per call) ----------
    w1p_bd = _block_diag_repeat(w1p.astype(jnp.float32), nm)     # (nm*D, nm*Hp)
    w2p_bd = _block_diag_repeat(w2p.astype(jnp.float32), nm)     # (nm*Hp, nm*10)
    b1p_t = jnp.tile(b1p.astype(jnp.float32), (1, nm))           # (1, nm*Hp)
    b2p_t = jnp.tile(b2p.astype(jnp.float32), (1, nm))           # (1, nm*10)
    w1m_obs = w1m[:D, :].astype(jnp.float32)                     # (D, Hh)
    w1m_msg = w1m[D:, :].astype(jnp.float32)                     # (nm*10, Hh)

    # Exact algebraic fold of pre-layer-2 into model-layer-1 (f32, then bf16).
    w_fold = w2p_bd @ w1m_msg                                    # (nm*Hp, Hh)
    b_fold = b2p_t @ w1m_msg + b1m.astype(jnp.float32)           # (1, Hh)

    # Single fused first-layer weight: rows = full obs slab [agent0 | senders],
    # cols = [message hidden (nm*Hp) | model hidden from agent0 (Hh)].
    w_first = jnp.zeros((ND, nmhp + Hh), jnp.float32)
    w_first = w_first.at[D:, :nmhp].set(w1p_bd)                  # senders -> msg hidden
    w_first = w_first.at[:D, nmhp:].set(w1m_obs)                 # agent 0 -> model hidden

    # Lane-dense (128-wide) output head.
    w2m_pad = jnp.zeros((Hh, OUT_PAD), jnp.float32).at[:, :action_dim].set(
        w2m.astype(jnp.float32))
    b2m_pad = jnp.zeros((1, OUT_PAD), jnp.float32).at[:, :action_dim].set(
        b2m.astype(jnp.float32))

    w_first_c = w_first.astype(compute_dtype)
    w_fold_c = w_fold.astype(compute_dtype)
    w2m_c = w2m_pad.astype(compute_dtype)
    b1p_f = b1p_t                                                # f32
    b_fold_f = b_fold                                            # f32
    b2m_f = b2m_pad                                              # f32

    # ---- obs: single f32 slab, cast to bf16 inside the kernel --------------
    x = obs.reshape(B, ND).astype(jnp.float32)

    # ---- batch tiling -------------------------------------------------------
    tb = min(tile_b, _round_up(max(B, 1), 16))
    # v7x megacore: keep >=2 grid steps when the batch is big enough so both
    # TensorCores get work (no-op on v5e/v6e, harmless otherwise).
    if B >= 512 and _round_up(B, tb) // tb < 2:
        tb = _round_up((B + 1) // 2, 16)
    b_pad = _round_up(B, tb)
    if b_pad != B:
        x = jnp.pad(x, ((0, b_pad - B), (0, 0)))
    grid = (b_pad // tb,)

    def kernel(x_ref, wf_ref, b1p_ref, wfold_ref, bfold_ref,
               w2m_ref, b2m_ref, out_ref):
        cdt = wf_ref.dtype                       # bf16 MXU input dtype
        xb = x_ref[...].astype(cdt)              # in-kernel cast after load
        # Fused first layer: one matmul covers both the per-agent message MLP
        # layer 1 (cols [:nmhp]) and the model layer-1 agent-0 term (cols [nmhp:]).
        z = jnp.dot(xb, wf_ref[...], preferred_element_type=jnp.float32)
        h = jnp.maximum(z[:, :nmhp] + b1p_ref[...], 0.0)          # f32 bias+ReLU
        acc = z[:, nmhp:] + bfold_ref[...] + jnp.dot(
            h.astype(cdt), wfold_ref[...], preferred_element_type=jnp.float32)
        hm = jnp.maximum(acc, 0.0)
        out = jnp.dot(hm.astype(cdt), w2m_ref[...],
                      preferred_element_type=jnp.float32) + b2m_ref[...]
        out_ref[...] = out.astype(out_ref.dtype)  # lane-dense (tb, 128) store

    def const_spec(arr):
        n = arr.ndim
        # Full-array block, constant index -> fetched once, VMEM-resident.
        return pl.BlockSpec(arr.shape, lambda b, _n=n: (0,) * _n)

    out = pl.pallas_call(
        kernel,
        out_shape=jax.ShapeDtypeStruct((b_pad, OUT_PAD), jnp.float32),
        grid=grid,
        in_specs=[
            pl.BlockSpec((tb, ND), lambda b: (b, 0)),
            const_spec(w_first_c), const_spec(b1p_f),
            const_spec(w_fold_c), const_spec(b_fold_f),
            const_spec(w2m_c), const_spec(b2m_f),
        ],
        out_specs=pl.BlockSpec((tb, OUT_PAD), lambda b: (b, 0)),
        compiler_params=pltpu.CompilerParams(
            dimension_semantics=("parallel",)),
    )(x, w_first_c, b1p_f, w_fold_c, b_fold_f, w2m_c, b2m_f)
    return out[:B, :action_dim]


def init_linear(key, fan_in, fan_out):
    """PyTorch nn.Linear default init: U(-1/sqrt(fan_in), 1/sqrt(fan_in))."""
    kw, kb = jax.random.split(key)
    bound = 1.0 / np.sqrt(fan_in)
    w = jax.random.uniform(kw, (fan_in, fan_out), jnp.float32, -bound, bound)
    b = jax.random.uniform(kb, (1, fan_out), jnp.float32, -bound, bound)
    return w, b


def msgnet_reference(obs, params, n_agents):
    """Plain-JAX f32 mirror of the PyTorch forward (obs.ndim == 5 branch)."""
    (w1p, b1p, w2p, b2p, w1m, b1m, w2m, b2m) = params
    B = obs.shape[0]
    obs = obs.astype(jnp.float32)

    def pre(x):  # x: (B, C, H, W)
        xf = x.reshape(B, -1)
        h = jnp.maximum(xf @ w1p + b1p, 0.0)
        return h @ w2p + b2p

    msgs = jnp.stack([pre(obs[:, i]) for i in range(1, n_agents)], axis=1)
    obs_ = jnp.concatenate([obs[:, 0].reshape(B, -1), msgs.reshape(B, -1)], axis=1)
    h = jnp.maximum(obs_ @ w1m + b1m, 0.0)
    return h @ w2m + b2m


if __name__ == "__main__":
    # state_shape = (N, C, H, W) = (3, 4, 4, 4); action_shape = 5; hidden = (32,)
    N_AGENTS, C, H, W = 3, 4, 4, 4
    ACTION_DIM = 5
    HIDDEN = 32
    D = C * H * W                              # 64
    PRE_OUT = 10
    MODEL_IN = D + PRE_OUT * (N_AGENTS - 1)    # 84

    root = jax.random.PRNGKey(0)
    k_obs, k_obs2, k1, k2, k3, k4 = jax.random.split(root, 6)

    # pre MLP: Linear(64, 32) -> ReLU -> Linear(32, 10)
    w1p, b1p = init_linear(k1, D, HIDDEN)
    w2p, b2p = init_linear(k2, HIDDEN, PRE_OUT)
    # model MLP: Linear(84, 32) -> ReLU -> Linear(32, 5)
    w1m, b1m = init_linear(k3, MODEL_IN, HIDDEN)
    w2m, b2m = init_linear(k4, HIDDEN, ACTION_DIM)
    params = (w1p, b1p, w2p, b2p, w1m, b1m, w2m, b2m)

    # Small batch (single grid step).  bf16 MXU inputs -> loosened tolerance.
    B = 2
    obs = jax.random.normal(k_obs, (B, N_AGENTS, C, H, W), jnp.float32)
    logits = jax.block_until_ready(
        msgnet_forward(obs, params, N_AGENTS, ACTION_DIM))
    ref = msgnet_reference(obs, params, N_AGENTS)
    np.testing.assert_allclose(np.asarray(logits), np.asarray(ref),
                               rtol=3e-2, atol=3e-2)

    # Larger, non-tile-multiple batch: exercises multi-step grid + padding.
    B2 = 300
    obs2 = jax.random.normal(k_obs2, (B2, N_AGENTS, C, H, W), jnp.float32)
    logits2 = jax.block_until_ready(
        msgnet_forward(obs2, params, N_AGENTS, ACTION_DIM, tile_b=128))
    ref2 = msgnet_reference(obs2, params, N_AGENTS)
    np.testing.assert_allclose(np.asarray(logits2), np.asarray(ref2),
                               rtol=3e-2, atol=3e-2)

    print("KERNEL_OK")
</pallas_src>

<mosaic_0001>
module attributes {stable_mosaic.version = 11 : i64} {
  func.func @kernel(%arg0: i32, %arg1: memref<16x192xf32, #tpu.memory_space<vmem>>, %arg2: memref<192x96xbf16, #tpu.memory_space<vmem>>, %arg3: memref<1x64xf32, #tpu.memory_space<vmem>>, %arg4: memref<64x32xbf16, #tpu.memory_space<vmem>>, %arg5: memref<1x32xf32, #tpu.memory_space<vmem>>, %arg6: memref<32x128xbf16, #tpu.memory_space<vmem>>, %arg7: memref<1x128xf32, #tpu.memory_space<vmem>>, %arg8: memref<16x128xf32, #tpu.memory_space<vmem>>) attributes {dimension_semantics = [#tpu.dimension_semantics<parallel>], iteration_bounds = array<i64: 1>, scalar_prefetch = 0 : i64, scratch_operands = 0 : i64, tpu.core_type = #tpu.core_type<tc>, window_params = [{transform_indices = @transform_0, window_bounds = array<i64: 16, 192>}, {pipeline_mode = #tpu.pipeline_mode<synchronous>, transform_indices = @transform_1, window_bounds = array<i64: 192, 96>}, {pipeline_mode = #tpu.pipeline_mode<synchronous>, transform_indices = @transform_2, window_bounds = array<i64: 1, 64>}, {pipeline_mode = #tpu.pipeline_mode<synchronous>, transform_indices = @transform_3, window_bounds = array<i64: 64, 32>}, {pipeline_mode = #tpu.pipeline_mode<synchronous>, transform_indices = @transform_4, window_bounds = array<i64: 1, 32>}, {pipeline_mode = #tpu.pipeline_mode<synchronous>, transform_indices = @transform_5, window_bounds = array<i64: 32, 128>}, {pipeline_mode = #tpu.pipeline_mode<synchronous>, transform_indices = @transform_6, window_bounds = array<i64: 1, 128>}, {transform_indices = @transform_7, window_bounds = array<i64: 16, 128>}]} {
    %c0 = arith.constant 0 : index
    %c0_0 = arith.constant 0 : index
    %0 = vector.load %arg1[%c0, %c0_0] : memref<16x192xf32, #tpu.memory_space<vmem>>, vector<16x192xf32>
    %1 = arith.truncf %0 : vector<16x192xf32> to vector<16x192xbf16>
    %c0_1 = arith.constant 0 : index
    %c0_2 = arith.constant 0 : index
    %2 = vector.load %arg2[%c0_1, %c0_2] : memref<192x96xbf16, #tpu.memory_space<vmem>>, vector<192x96xbf16>
    %cst = arith.constant dense<0.000000e+00> : vector<16x96xf32>
    %3 = tpu.matmul %1, %2, %cst {dimension_numbers = #tpu.dot_dimension_numbers<[1], [0], [0], [1], [0, 0, 1, 1], [], []>} : vector<16x192xbf16>, vector<192x96xbf16>, vector<16x96xf32> -> vector<16x96xf32>
    %4 = vector.extract_strided_slice %3 {offsets = [0, 0], sizes = [16, 64], strides = [1, 1]} : vector<16x96xf32> to vector<16x64xf32>
    %c0_3 = arith.constant 0 : index
    %c0_4 = arith.constant 0 : index
    %5 = vector.load %arg3[%c0_3, %c0_4] : memref<1x64xf32, #tpu.memory_space<vmem>>, vector<1x64xf32>
    %6 = vector.broadcast %5 : vector<1x64xf32> to vector<16x64xf32>
    %7 = arith.addf %4, %6 : vector<16x64xf32>
    %cst_5 = arith.constant 0.000000e+00 : f32
    %8 = vector.broadcast %cst_5 : f32 to vector<16x64xf32>
    %9 = arith.maximumf %7, %8 : vector<16x64xf32>
    %10 = vector.extract_strided_slice %3 {offsets = [0, 64], sizes = [16, 32], strides = [1, 1]} : vector<16x96xf32> to vector<16x32xf32>
    %c0_6 = arith.constant 0 : index
    %c0_7 = arith.constant 0 : index
    %11 = vector.load %arg5[%c0_6, %c0_7] : memref<1x32xf32, #tpu.memory_space<vmem>>, vector<1x32xf32>
    %12 = vector.broadcast %11 : vector<1x32xf32> to vector<16x32xf32>
    %13 = arith.addf %10, %12 : vector<16x32xf32>
    %14 = arith.truncf %9 : vector<16x64xf32> to vector<16x64xbf16>
    %c0_8 = arith.constant 0 : index
    %c0_9 = arith.constant 0 : index
    %15 = vector.load %arg4[%c0_8, %c0_9] : memref<64x32xbf16, #tpu.memory_space<vmem>>, vector<64x32xbf16>
    %cst_10 = arith.constant dense<0.000000e+00> : vector<16x32xf32>
    %16 = tpu.matmul %14, %15, %cst_10 {dimension_numbers = #tpu.dot_dimension_numbers<[1], [0], [0], [1], [0, 0, 1, 1], [], []>} : vector<16x64xbf16>, vector<64x32xbf16>, vector<16x32xf32> -> vector<16x32xf32>
    %17 = arith.addf %13, %16 : vector<16x32xf32>
    %cst_11 = arith.constant 0.000000e+00 : f32
    %18 = vector.broadcast %cst_11 : f32 to vector<16x32xf32>
    %19 = arith.maximumf %17, %18 : vector<16x32xf32>
    %20 = arith.truncf %19 : vector<16x32xf32> to vector<16x32xbf16>
    %c0_12 = arith.constant 0 : index
    %c0_13 = arith.constant 0 : index
    %21 = vector.load %arg6[%c0_12, %c0_13] : memref<32x128xbf16, #tpu.memory_space<vmem>>, vector<32x128xbf16>
    %cst_14 = arith.constant dense<0.000000e+00> : vector<16x128xf32>
    %22 = tpu.matmul %20, %21, %cst_14 {dimension_numbers = #tpu.dot_dimension_numbers<[1], [0], [0], [1], [0, 0, 1, 1], [], []>} : vector<16x32xbf16>, vector<32x128xbf16>, vector<16x128xf32> -> vector<16x128xf32>
    %c0_15 = arith.constant 0 : index
    %c0_16 = arith.constant 0 : index
    %23 = vector.load %arg7[%c0_15, %c0_16] : memref<1x128xf32, #tpu.memory_space<vmem>>, vector<1x128xf32>
    %24 = vector.broadcast %23 : vector<1x128xf32> to vector<16x128xf32>
    %25 = arith.addf %22, %24 : vector<16x128xf32>
    %c0_17 = arith.constant 0 : index
    %c0_18 = arith.constant 0 : index
    %26 = vector.load %arg8[%c0_17, %c0_18] : memref<16x128xf32, #tpu.memory_space<vmem>>, vector<16x128xf32>
    tpu.vector_store %arg8[%c0_17, %c0_18], %25 {strides = array<i32>} : memref<16x128xf32, #tpu.memory_space<vmem>>, vector<16x128xf32>,
    return
  }
  func.func @transform_0(%arg0: i32) -> (i32, i32) {
    %c0_i32 = arith.constant 0 : i32
    %c0_i32_0 = arith.constant 0 : i32
    return %arg0, %c0_i32 : i32, i32
  }
  func.func @transform_1(%arg0: i32) -> (i32, i32) {
    %c0_i32 = arith.constant 0 : i32
    %c0_i32_0 = arith.constant 0 : i32
    %c0_i32_1 = arith.constant 0 : i32
    return %c0_i32, %c0_i32_0 : i32, i32
  }
  func.func @transform_2(%arg0: i32) -> (i32, i32) {
    %c0_i32 = arith.constant 0 : i32
    %c0_i32_0 = arith.constant 0 : i32
    %c0_i32_1 = arith.constant 0 : i32
    return %c0_i32, %c0_i32_0 : i32, i32
  }
  func.func @transform_3(%arg0: i32) -> (i32, i32) {
    %c0_i32 = arith.constant 0 : i32
    %c0_i32_0 = arith.constant 0 : i32
    %c0_i32_1 = arith.constant 0 : i32
    return %c0_i32, %c0_i32_0 : i32, i32
  }
  func.func @transform_4(%arg0: i32) -> (i32, i32) {
    %c0_i32 = arith.constant 0 : i32
    %c0_i32_0 = arith.constant 0 : i32
    %c0_i32_1 = arith.constant 0 : i32
    return %c0_i32, %c0_i32_0 : i32, i32
  }
  func.func @transform_5(%arg0: i32) -> (i32, i32) {
    %c0_i32 = arith.constant 0 : i32
    %c0_i32_0 = arith.constant 0 : i32
    %c0_i32_1 = arith.constant 0 : i32
    return %c0_i32, %c0_i32_0 : i32, i32
  }
  func.func @transform_6(%arg0: i32) -> (i32, i32) {
    %c0_i32 = arith.constant 0 : i32
    %c0_i32_0 = arith.constant 0 : i32
    %c0_i32_1 = arith.constant 0 : i32
    return %c0_i32, %c0_i32_0 : i32, i32
  }
  func.func @transform_7(%arg0: i32) -> (i32, i32) {
    %c0_i32 = arith.constant 0 : i32
    %c0_i32_0 = arith.constant 0 : i32
    return %arg0, %c0_i32 : i32, i32
  }
}

</mosaic_0001>

<llo_original>
// kernel: tpu_custom_call.1
$region0: #{tpu_custom_call.1}
  #allocation0 [shape = 'u32[]', space=smem, size = 0x4, offset = 0x4, fixed_abs, tag = 'smem constant byte address 0x4 - core index']
  #allocation1 [shape = 'u32[72,128]{1,0:T(1,128)}', space=vmem, size = 0x9000, scoped, tag = 'internal scratch']
  %s0 = inlined_call_operand.vmem [shape: f32[16,192], index: 0, kind: input, shape index: {}]
  %s1 = inlined_call_operand.hbm [shape: bf16[192,96], index: 1, kind: input, shape index: {}]
  %s2 = inlined_call_operand.vmem [shape: f32[1,64], index: 2, kind: input, shape index: {}]
  %s3 = inlined_call_operand.vmem [shape: bf16[64,32], index: 3, kind: input, shape index: {}]
  %s4 = inlined_call_operand.vmem [shape: f32[1,32], index: 4, kind: input, shape index: {}]
  %s5 = inlined_call_operand.vmem [shape: bf16[32,128], index: 5, kind: input, shape index: {}]
  %s6 = inlined_call_operand.vmem [shape: f32[1,128], index: 6, kind: input, shape index: {}]
  %s7 = inlined_call_operand.hbm [shape: f32[16,128], index: 7, kind: output, shape index: {}]
  %s8 = sld [smem:[#allocation0]]
  $region42: #{tpu_custom_call.1} parent=0
    _
  %s10 = ssub.s32 1, %s8
  %s11 = scalar_select 0, %s10, %s8
  $region1: #{tpu_custom_call.1} parent=0
    #allocation2 [shape = 'u8[49152]{0}', space=vmem, size = 0xc000, scoped, tag = 'input window, operand 1, single buffered']
    #allocation3 [shape = 's32[1]{0}', space=sflag, size = 0x4, scoped, tag = 'scoped memory for tpu_custom_call.1']
    #allocation4 [shape = 's32[1]{0}', space=sflag, size = 0x4, scoped, tag = 'scoped memory for tpu_custom_call.1']
    #allocation5 [shape = 'u8[8192]{0}', space=vmem, size = 0x2000, scoped, tag = 'output window, operand 0, single buffered']
    %12 = vsyncpa [#allocation3], 0
    %13 = vsyncpa [#allocation4], 0
    // Predicated region
    $region2: #{tpu_custom_call.1} parent=1 // pred_check
      _
    $region3: #{tpu_custom_call.1} parent=1 // pred_check_branch
      %15 = sbr.rel (0) target = $region5
    $region4: #{tpu_custom_call.1} parent=1 // pred_region
      _
    $region5: #{tpu_custom_call.1} parent=1 // pred_fallthru
      _
    // Predicated region
    $region6: #{tpu_custom_call.1} parent=1 // pred_check
      _
    $region7: #{tpu_custom_call.1} parent=1 // pred_check_branch
      %17 = sbr.rel (0) target = $region9
    $region8: #{tpu_custom_call.1} parent=1 // pred_region
      %19 = vsyncadd [#allocation3], 0
      %s20 = sshll.u32 %s1, 4
      %s21 = int_to_ptr.hbm [resolvable:$true] %s20
      %s22 = sshll.u32 [#allocation2], 4
      %s23 = int_to_ptr.vmem [resolvable:$true] %s22
      %28 = dma.hbm_to_vmem [thread:$0]  %s21, 1536, %s23, [#allocation3], 64, 64, 4
    $region9: #{tpu_custom_call.1} parent=1 // pred_fallthru
      _
    // Predicated region
    $region10: #{tpu_custom_call.1} parent=1 // pred_check
      _
    $region11: #{tpu_custom_call.1} parent=1 // pred_check_branch
      %30 = sbr.rel (0) target = $region13
    $region12: #{tpu_custom_call.1} parent=1 // pred_region
      _
    $region13: #{tpu_custom_call.1} parent=1 // pred_fallthru
      _
    // Predicated region
    $region14: #{tpu_custom_call.1} parent=1 // pred_check
      _
    $region15: #{tpu_custom_call.1} parent=1 // pred_check_branch
      %32 = sbr.rel (0) target = $region17
    $region16: #{tpu_custom_call.1} parent=1 // pred_region
      _
    $region17: #{tpu_custom_call.1} parent=1 // pred_fallthru
      _
    // Predicated region
    $region18: #{tpu_custom_call.1} parent=1 // pred_check
      _
    $region19: #{tpu_custom_call.1} parent=1 // pred_check_branch
      %34 = sbr.rel (0) target = $region21
    $region20: #{tpu_custom_call.1} parent=1 // pred_region
      _
    $region21: #{tpu_custom_call.1} parent=1 // pred_fallthru
      _
    // Predicated region
    $region22: #{tpu_custom_call.1} parent=1 // pred_check
      _
    $region23: #{tpu_custom_call.1} parent=1 // pred_check_branch
      %36 = sbr.rel (0) target = $region25
    $region24: #{tpu_custom_call.1} parent=1 // pred_region
      _
    $region25: #{tpu_custom_call.1} parent=1 // pred_fallthru
      _
    // Predicated region
    $region26: #{tpu_custom_call.1} parent=1 // pred_check
      _
    $region27: #{tpu_custom_call.1} parent=1 // pred_check_branch
      %38 = sbr.rel (0) target = $region29
    $region28: #{tpu_custom_call.1} parent=1 // pred_region
      _
    $region29: #{tpu_custom_call.1} parent=1 // pred_fallthru
      _
    // Predicated region
    $region30: #{tpu_custom_call.1} parent=1 // pred_check
      _
    $region31: #{tpu_custom_call.1} parent=1 // pred_check_branch
      %40 = sbr.rel (0) target = $region33
    $region32: #{tpu_custom_call.1} parent=1 // pred_region
      %42 = dma.done [#allocation3], 1536
    $region33: #{tpu_custom_call.1} parent=1 // pred_fallthru
      _
    %v44 = vld [vmem:[%s0] sm:$0xff]
    %v45 = vld [vmem:[%s0 + $0x8] sm:$0xff]
    %v46 = vld [vmem:[%s0 + $0x10] sm:$0xff]
    %v47 = vld [vmem:[%s0 + $0x18] sm:$0xff]
    %v48 = vpack.c.bf16 %v46, %v44
    %v49 = vpack.c.bf16 %v47, %v45
    %v50 = vld [vmem:[#allocation2] sm:$0xf]
    %v51 = vld [vmem:[#allocation2 + $0x4] sm:$0xf]
    %v52 = vld [vmem:[#allocation2 + $0x8] sm:$0xf]
    %v53 = vld [vmem:[#allocation2 + $0xc] sm:$0xf]
    %v54 = vld [vmem:[#allocation2 + $0x10] sm:$0xf]
    %v55 = vld [vmem:[#allocation2 + $0x14] sm:$0xf]
    %v56 = vld [vmem:[#allocation2 + $0x18] sm:$0xf]
    %v57 = vld [vmem:[#allocation2 + $0x1c] sm:$0xf]
    %v58 = vld [vmem:[#allocation2 + $0x20] sm:$0xf]
    %v59 = vld [vmem:[#allocation2 + $0x24] sm:$0xf]
    %v60 = vld [vmem:[#allocation2 + $0x28] sm:$0xf]
    %v61 = vld [vmem:[#allocation2 + $0x2c] sm:$0xf]
    %v62 = vld [vmem:[#allocation2 + $0x30] sm:$0xf]
    %v63 = vld [vmem:[#allocation2 + $0x34] sm:$0xf]
    %v64 = vld [vmem:[#allocation2 + $0x38] sm:$0xf]
    %v65 = vld [vmem:[#allocation2 + $0x3c] sm:$0xf]
    %v66 = vld [vmem:[#allocation2 + $0x40] sm:$0xf]
    %v67 = vld [vmem:[#allocation2 + $0x44] sm:$0xf]
    %v68 = vld [vmem:[#allocation2 + $0x48] sm:$0xf]
    %v69 = vld [vmem:[#allocation2 + $0x4c] sm:$0xf]
    %v70 = vld [vmem:[#allocation2 + $0x50] sm:$0xf]
    %v71 = vld [vmem:[#allocation2 + $0x54] sm:$0xf]
    %v72 = vld [vmem:[#allocation2 + $0x58] sm:$0xf]
    %v73 = vld [vmem:[#allocation2 + $0x5c] sm:$0xf]
    %v98 = vunpack.c.l.b16 %v50
    %v99 = vunpack.c.l.b16 %v51
    %v100 = vunpack.c.l.b16 %v52
    %v101 = vunpack.c.l.b16 %v53
    %v102 = vunpack.c.l.b16 %v54
    %v103 = vunpack.c.l.b16 %v55
    %v104 = vunpack.c.l.b16 %v56
    %v105 = vunpack.c.l.b16 %v57
    %v106 = vunpack.c.l.b16 %v58
    %v107 = vunpack.c.l.b16 %v59
    %v108 = vunpack.c.l.b16 %v60
    %v109 = vunpack.c.l.b16 %v61
    %v110 = vunpack.c.l.b16 %v62
    %v111 = vunpack.c.l.b16 %v63
    %v112 = vunpack.c.l.b16 %v64
    %v113 = vunpack.c.l.b16 %v65
    %v114 = vunpack.c.l.b16 %v66
    %v115 = vunpack.c.l.b16 %v67
    %v116 = vunpack.c.l.b16 %v68
    %v117 = vunpack.c.l.b16 %v69
    %v118 = vunpack.c.l.b16 %v70
    %v119 = vunpack.c.l.b16 %v71
    %v120 = vunpack.c.l.b16 %v72
    %v121 = vunpack.c.l.b16 %v73
    %v122 = vpack.c.b16 %v99, %v98
    %v123 = vpack.c.b16 %v101, %v100
    %v124 = vpack.c.b16 %v103, %v102
    %v125 = vpack.c.b16 %v105, %v104
    %v126 = vpack.c.b16 %v107, %v106
    %v127 = vpack.c.b16 %v109, %v108
    %v128 = vpack.c.b16 %v111, %v110
    %v129 = vpack.c.b16 %v113, %v112
    %v130 = vpack.c.b16 %v115, %v114
    %v131 = vpack.c.b16 %v117, %v116
    %v132 = vpack.c.b16 %v119, %v118
    %v133 = vpack.c.b16 %v121, %v120
    %vm146 = vcmask 523264
    %v148 = vsel %vm146, %v49, 0
    %150 = vmatpush.bf16.msra.mxu0 %v129
    %151 = vmatpush.bf16.msra.mxu0 %v128
    %152 = vmatpush.bf16.msra.mxu0 %v127
    %153 = vmatpush.bf16.msra.mxu0 %v126
    %154 = vmatpush.bf16.msra.mxu0 %v125
    %155 = vmatpush.bf16.msra.mxu0 %v124
    %156 = vmatpush.bf16.msra.mxu0 %v123
    %157 = vmatpush.bf16.msra.mxu0 %v122
    %158 = vmatmul.bf16.gmra.mxu0 %v48
    %v159 = vpop.f32.mrf.mxu0
    %v160 = vadd.f32 0.0, %v159
    %v161 = vpop.f32.mrf.mxu0
    %v162 = vadd.f32 0.0, %v161
    %163 = vdwg.mxu0
    %164 = vmatpush.bf16.msra.mxu0 0
    %165 = vmatpush.bf16.msra.mxu0 0
    %166 = vmatpush.bf16.msra.mxu0 0
    %167 = vmatpush.bf16.msra.mxu0 0
    %168 = vmatpush.bf16.msra.mxu0 %v133
    %169 = vmatpush.bf16.msra.mxu0 %v132
    %170 = vmatpush.bf16.msra.mxu0 %v131
    %171 = vmatpush.bf16.msra.mxu0 %v130
    %172 = vmatmul.bf16.gmra.mxu0 %v148
    %v173 = vpop.f32.mrf.mxu0
    %v174 = vadd.f32 %v160, %v173
    %v175 = vpop.f32.mrf.mxu0
    %v176 = vadd.f32 %v162, %v175
    %177 = vdwg.mxu0
    %v178 = vld [vmem:[%s2] sm:$0x1]
    %v180 = vperm.slane %v178, 0
    %v182 = vadd.f32 %v174, %v180
    %v183 = vadd.f32 %v176, %v180
    %v184 = vmax.f32 %v182, 0.0
    %v185 = vmax.f32 %v183, 0.0
    %v186 = vld [vmem:[%s4] sm:$0x1]
    %v188 = vperm.slane %v186, 0
    %189 = vrot.lane.b32.xlu0 %v188, 64
    %v190 = vpop.permute.xlu0 %189
    %v192 = vadd.f32 %v174, %v190
    %v193 = vadd.f32 %v176, %v190
    %v194 = vpack.c.bf16 %v185, %v184
    %v195 = vld [vmem:[%s3] sm:$0xf]
    %v196 = vld [vmem:[%s3 + $0x4] sm:$0xf]
    %v197 = vld [vmem:[%s3 + $0x8] sm:$0xf]
    %v198 = vld [vmem:[%s3 + $0xc] sm:$0xf]
    %v199 = vld [vmem:[%s3 + $0x10] sm:$0xf]
    %v200 = vld [vmem:[%s3 + $0x14] sm:$0xf]
    %v201 = vld [vmem:[%s3 + $0x18] sm:$0xf]
    %v202 = vld [vmem:[%s3 + $0x1c] sm:$0xf]
    %v211 = vunpack.c.l.b16 %v195
    %v212 = vunpack.c.l.b16 %v196
    %v213 = vunpack.c.l.b16 %v197
    %v214 = vunpack.c.l.b16 %v198
    %v215 = vunpack.c.l.b16 %v199
    %v216 = vunpack.c.l.b16 %v200
    %v217 = vunpack.c.l.b16 %v201
    %v218 = vunpack.c.l.b16 %v202
    %v219 = vpack.c.b16 %v212, %v211
    %v220 = vpack.c.b16 %v214, %v213
    %v221 = vpack.c.b16 %v216, %v215
    %v222 = vpack.c.b16 %v218, %v217
    %v228 = vsel %vm146, %v194, 0
    %230 = vmatpush.bf16.msra.mxu0 0
    %231 = vmatpush.bf16.msra.mxu0 0
    %232 = vmatpush.bf16.msra.mxu0 0
    %233 = vmatpush.bf16.msra.mxu0 0
    %234 = vmatpush.bf16.msra.mxu0 %v222
    %235 = vmatpush.bf16.msra.mxu0 %v221
    %236 = vmatpush.bf16.msra.mxu0 %v220
    %237 = vmatpush.bf16.msra.mxu0 %v219
    %238 = vmatmul.bf16.gmra.mxu0 %v228
    %v239 = vpop.f32.mrf.mxu0
    %v240 = vadd.f32 0.0, %v239
    %v241 = vpop.f32.mrf.mxu0
    %v242 = vadd.f32 0.0, %v241
    %243 = vdwg.mxu0
    %246 = vrot.lane.b32.xlu0 %v240, 64
    %v247 = vpop.permute.xlu0 %246
    %248 = vrot.lane.b32.xlu0 %v242, 64
    %v249 = vpop.permute.xlu0 %248
    %v252 = vadd.f32 %v192, %v247
    %v253 = vadd.f32 %v193, %v249
    %v254 = vmax.f32 %v252, 0.0
    %v255 = vmax.f32 %v253, 0.0
    %v256 = vpack.c.bf16 %v255, %v254
    %v257 = vld [vmem:[%s5] sm:$0xf]
    %v258 = vld [vmem:[%s5 + $0x4] sm:$0xf]
    %v259 = vld [vmem:[%s5 + $0x8] sm:$0xf]
    %v260 = vld [vmem:[%s5 + $0xc] sm:$0xf]
    %v261 = vld [vmem:[%s6] sm:$0x1]
    %v263 = vperm.slane %v261, 0
    %266 = vrot.lane.b32.xlu0 %v256, 64
    %v267 = vpop.permute.xlu0 %266
    %v272 = vunpack.c.l.b16 %v257
    %v273 = vunpack.c.l.b16 %v258
    %v274 = vunpack.c.l.b16 %v259
    %v275 = vunpack.c.l.b16 %v260
    %v276 = vpack.c.b16 %v273, %v272
    %v277 = vpack.c.b16 %v275, %v274
    %vm280 = vcmask 261120
    %v282 = vsel %vm280, %v267, 0
    %284 = vmatpush.bf16.msra.mxu0 0
    %285 = vmatpush.bf16.msra.mxu0 0
    %286 = vmatpush.bf16.msra.mxu0 0
    %287 = vmatpush.bf16.msra.mxu0 0
    %288 = vmatpush.bf16.msra.mxu0 0
    %289 = vmatpush.bf16.msra.mxu0 0
    %290 = vmatpush.bf16.msra.mxu0 %v277
    %291 = vmatpush.bf16.msra.mxu0 %v276
    %292 = vmatmul.bf16.gmra.mxu0 %v282
    %v293 = vpop.f32.mrf.mxu0
    %v294 = vadd.f32 %v263, %v293
    %v295 = vpop.f32.mrf.mxu0
    %v296 = vadd.f32 %v263, %v295
    %297 = vdwg.mxu0
    %298 = vst [vmem:[#allocation5] sm:$0xff] %v294
    %299 = vst [vmem:[#allocation5 + $0x8] sm:$0xff] %v296
    // Predicated region
    $region34: #{tpu_custom_call.1} parent=1 // pred_check
      _
    $region35: #{tpu_custom_call.1} parent=1 // pred_check_branch
      %301 = sbr.rel (0) target = $region37
    $region36: #{tpu_custom_call.1} parent=1 // pred_region
      %303 = vsyncadd [#allocation4], 0
      %s304 = sshll.u32 [#allocation5], 4
      %s305 = int_to_ptr.vmem [resolvable:$true] %s304
      %s306 = sshll.u32 %s7, 4
      %s307 = int_to_ptr.hbm [resolvable:$true] %s306
      %312 = dma.vmem_to_hbm [thread:$0]  %s305, 256, %s307, [#allocation4], 128, 128, 8
    $region37: #{tpu_custom_call.1} parent=1 // pred_fallthru
      _
    // Predicated region
    $region38: #{tpu_custom_call.1} parent=1 // pred_check
      _
    $region39: #{tpu_custom_call.1} parent=1 // pred_check_branch
      %314 = sbr.rel (0) target = $region41
    $region40: #{tpu_custom_call.1} parent=1 // pred_region
      %316 = dma.done [#allocation4], 256
    $region41: #{tpu_custom_call.1} parent=1 // pred_fallthru
      _
    %317 = vsyncpa [#allocation3], 1
    %318 = vsyncpa [#allocation4], 1

</llo_original>
